<compile_context>
chip_gen: v5e
topology: v5e:2x2
jax: 0.10.0
libtpu: 0.0.40
codegen_flags: <defaults>
</compile_context>

<pallas_src>
import math

import jax
import jax.numpy as jnp
from jax.experimental import pallas as pl
from jax.experimental.pallas import tpu as pltpu


def _ceil_to(n: int, m: int) -> int:
    return ((n + m - 1) // m) * m


# ---------------------------------------------------------------------------
# Parameter packing (glue code, runs outside the kernel)
# ---------------------------------------------------------------------------
def pack_params(params):
    """Pack all Linear weights/biases into two contiguous f32 slabs.

    slab_a (rows_a, WIDE=1024): hidden trunk weights/biases (lane-padded) and the
        fused head layer-1 weight [wv1|wa1] + bias [bv1|ba1].
    slab_b (WIDE+1, 1+A): block-diagonal head layer-2 weight (wv2 / wa2) with the
        fused bias [bv2|ba2] as the last row.

    Returns (slab_a, slab_b, layout) where layout holds static row offsets.
    """
    hidden = params["hidden"]
    (wv1, bv1), (wv2, bv2) = params["value"]
    (wa1, ba1), (wa2, ba2) = params["advantage"]

    action_size = wa2.shape[1]
    h_last = wv1.shape[0]
    wide = wv1.shape[1] + wa1.shape[1]  # 512 + 512 = 1024 (lane-dense, 8*128)

    layout = {"hidden": [], "h_last": h_last, "wide": wide,
              "action_size": action_size}

    entries = []  # (row_start, array padded to `wide` lanes)
    row = 0

    def _place(arr):
        nonlocal row
        start = row
        row = _ceil_to(start + arr.shape[0], 8)  # 8-aligned row offsets
        padded = jnp.zeros((arr.shape[0], wide), jnp.float32)
        padded = padded.at[:, : arr.shape[1]].set(arr.astype(jnp.float32))
        entries.append((start, padded))
        return start

    for w, b in hidden:
        rw = _place(w)
        rb = _place(b)
        layout["hidden"].append((rw, rb, int(w.shape[0]), int(w.shape[1])))

    w1_fused = jnp.concatenate([wv1, wa1], axis=1)  # (H, 1024)
    b1_fused = jnp.concatenate([bv1, ba1], axis=1)  # (1, 1024)
    layout["w1"] = _place(w1_fused)
    layout["b1"] = _place(b1_fused)

    rows_a = row
    slab_a = jnp.zeros((rows_a, wide), jnp.float32)
    for start, arr in entries:
        slab_a = slab_a.at[start : start + arr.shape[0], :].set(arr)

    # Block-diagonal second layer: col 0 <- value head, cols 1: <- advantage head.
    n_out = 1 + action_size
    w2 = jnp.zeros((wide, n_out), jnp.float32)
    w2 = w2.at[: wv1.shape[1], 0:1].set(wv2.astype(jnp.float32))
    w2 = w2.at[wv1.shape[1] :, 1:].set(wa2.astype(jnp.float32))
    b2 = jnp.concatenate([bv2, ba2], axis=1).astype(jnp.float32)  # (1, 1+A)
    slab_b = jnp.concatenate([w2, b2], axis=0)  # (wide + 1, 1+A)

    return slab_a, slab_b, layout


# ---------------------------------------------------------------------------
# Kernel
# ---------------------------------------------------------------------------
def _make_kernel(layout):
    hidden_layout = layout["hidden"]
    w1_row = layout["w1"]
    b1_row = layout["b1"]
    h_last = layout["h_last"]
    wide = layout["wide"]
    action_size = layout["action_size"]

    def kernel(x_ref, slab_a_ref, slab_b_ref, out_ref):
        h = x_ref[...]  # (B, S)

        # Hidden MLP trunk: Linear -> ReLU (dropout == identity at inference).
        for rw, rb, d_in, d_out in hidden_layout:
            w = slab_a_ref[rw : rw + d_in, 0:d_out]
            b = slab_a_ref[rb : rb + 1, 0:d_out]
            h = jnp.maximum(
                jnp.dot(h, w, preferred_element_type=jnp.float32) + b, 0.0
            )

        # Fused head layer 1: (B, H) @ (H, 1024) -> [value_hidden | adv_hidden].
        w1 = slab_a_ref[w1_row : w1_row + h_last, :]
        b1 = slab_a_ref[b1_row : b1_row + 1, :]
        h1 = jnp.maximum(
            jnp.dot(h, w1, preferred_element_type=jnp.float32) + b1, 0.0
        )

        # Fused block-diagonal layer 2: (B, 1024) @ (1024, 1+A) -> [value | adv].
        w2 = slab_b_ref[0:wide, :]
        b2 = slab_b_ref[wide : wide + 1, :]
        va = jnp.dot(h1, w2, preferred_element_type=jnp.float32) + b2  # (B, 1+A)

        v = va[:, 0:1]                       # (B, 1)
        a = va[:, 1 : 1 + action_size]       # (B, A)
        # advantage = advantage - advantage.mean()  (GLOBAL mean, as in PyTorch)
        a = a - jnp.mean(a)
        out_ref[...] = v + a                 # value broadcasts over actions

    return kernel


# ---------------------------------------------------------------------------
# Wrappers
# ---------------------------------------------------------------------------
def dueling_q_forward_packed(x, slab_a, slab_b, layout):
    batch = x.shape[0]
    action_size = layout["action_size"]
    kernel = _make_kernel(layout)

    def full_spec(a):
        return pl.BlockSpec(a.shape, lambda: (0,) * a.ndim)

    return pl.pallas_call(
        kernel,
        out_shape=jax.ShapeDtypeStruct((batch, action_size), jnp.float32),
        grid=(),
        in_specs=[full_spec(x), full_spec(slab_a), full_spec(slab_b)],
        out_specs=pl.BlockSpec((batch, action_size), lambda: (0, 0)),
        compiler_params=pltpu.CompilerParams(vmem_limit_bytes=8 << 20),
    )(x, slab_a, slab_b)


def dueling_q_forward(x, params):
    slab_a, slab_b, layout = pack_params(params)
    return dueling_q_forward_packed(x, slab_a, slab_b, layout)


# ---------------------------------------------------------------------------
# Parameter init (mirrors DuelingQNetwork.__init__) and pure-JAX reference
# ---------------------------------------------------------------------------
def _xavier_uniform(key, fan_in, fan_out):
    """torch.nn.init.xavier_uniform_ (gain=1): U(-a, a), a = sqrt(6/(fan_in+fan_out)).
    Stored PRE-TRANSPOSED as (in, out) so the kernel does x @ W directly."""
    bound = math.sqrt(6.0 / (fan_in + fan_out))
    return jax.random.uniform(
        key, (fan_in, fan_out), dtype=jnp.float32, minval=-bound, maxval=bound
    )


def init_params(key, state_size, action_size, hidden_layers):
    params = {"hidden": [], "value": [], "advantage": []}
    sizes = [state_size] + list(hidden_layers)
    keys = jax.random.split(key, len(hidden_layers) + 4)
    ki = 0
    for h1, h2 in zip(sizes[:-1], sizes[1:]):
        w = _xavier_uniform(keys[ki], h1, h2)
        b = jnp.full((1, h2), 0.01, dtype=jnp.float32)
        params["hidden"].append((w, b))
        ki += 1
    h_last = hidden_layers[-1]
    params["value"].append((_xavier_uniform(keys[ki], h_last, 512),
                            jnp.full((1, 512), 0.01, dtype=jnp.float32))); ki += 1
    params["value"].append((_xavier_uniform(keys[ki], 512, 1),
                            jnp.full((1, 1), 0.01, dtype=jnp.float32))); ki += 1
    params["advantage"].append((_xavier_uniform(keys[ki], h_last, 512),
                                jnp.full((1, 512), 0.01, dtype=jnp.float32))); ki += 1
    params["advantage"].append((_xavier_uniform(keys[ki], 512, action_size),
                                jnp.full((1, action_size), 0.01, dtype=jnp.float32))); ki += 1
    return params


def _reference_forward(x, params):
    h = x
    for w, b in params["hidden"]:
        h = jnp.maximum(h @ w + b, 0.0)
    v = jnp.maximum(h @ params["value"][0][0] + params["value"][0][1], 0.0)
    v = v @ params["value"][1][0] + params["value"][1][1]
    a = jnp.maximum(h @ params["advantage"][0][0] + params["advantage"][0][1], 0.0)
    a = a @ params["advantage"][1][0] + params["advantage"][1][1]
    a = a - jnp.mean(a)
    return v + a


if __name__ == "__main__":
    batch = 8
    state_size = 16
    action_size = 8
    hidden_layers = [64, 64]

    key = jax.random.PRNGKey(0)
    k_params, k_x = jax.random.split(key)
    params = init_params(k_params, state_size, action_size, hidden_layers)
    x = jax.random.normal(k_x, (batch, state_size), dtype=jnp.float32)

    # Pack once (glue); pass two contiguous slabs to the kernel.
    slab_a, slab_b, layout = pack_params(params)
    slab_a = jax.block_until_ready(slab_a)
    slab_b = jax.block_until_ready(slab_b)

    q = dueling_q_forward_packed(x, slab_a, slab_b, layout)
    q = jax.block_until_ready(q)

    ref = _reference_forward(x, params)
    assert q.shape == (batch, action_size)
    assert jnp.allclose(q, ref, atol=1e-4, rtol=1e-4), "Pallas kernel mismatch vs reference"

    print("KERNEL_OK")
</pallas_src>

<mosaic_0001>
module attributes {stable_mosaic.version = 11 : i64} {
  func.func @kernel(%arg0: memref<8x16xf32, #tpu.memory_space<vmem>>, %arg1: memref<168x1024xf32, #tpu.memory_space<vmem>>, %arg2: memref<1025x9xf32, #tpu.memory_space<vmem>>, %arg3: memref<8x8xf32, #tpu.memory_space<vmem>>) attributes {dimension_semantics = [], scalar_prefetch = 0 : i64, scratch_operands = 0 : i64, tpu.core_type = #tpu.core_type<tc>} {
    %c0 = arith.constant 0 : index
    %c0_0 = arith.constant 0 : index
    %0 = vector.load %arg0[%c0, %c0_0] : memref<8x16xf32, #tpu.memory_space<vmem>>, vector<8x16xf32>
    %c0_1 = arith.constant 0 : index
    %c0_2 = arith.constant 0 : index
    %1 = vector.load %arg1[%c0_1, %c0_2] : memref<168x1024xf32, #tpu.memory_space<vmem>>, vector<16x64xf32>
    %c16 = arith.constant 16 : index
    %c0_3 = arith.constant 0 : index
    %2 = vector.load %arg1[%c16, %c0_3] : memref<168x1024xf32, #tpu.memory_space<vmem>>, vector<1x64xf32>
    %cst = arith.constant dense<0.000000e+00> : vector<8x64xf32>
    %3 = tpu.matmul %0, %1, %cst {dimension_numbers = #tpu.dot_dimension_numbers<[1], [0], [0], [1], [0, 0, 1, 1], [], []>} : vector<8x16xf32>, vector<16x64xf32>, vector<8x64xf32> -> vector<8x64xf32>
    %4 = vector.broadcast %2 : vector<1x64xf32> to vector<8x64xf32>
    %5 = arith.addf %3, %4 : vector<8x64xf32>
    %cst_4 = arith.constant 0.000000e+00 : f32
    %6 = vector.broadcast %cst_4 : f32 to vector<8x64xf32>
    %7 = arith.maximumf %5, %6 : vector<8x64xf32>
    %c24 = arith.constant 24 : index
    %c0_5 = arith.constant 0 : index
    %8 = vector.load %arg1[%c24, %c0_5] : memref<168x1024xf32, #tpu.memory_space<vmem>>, vector<64x64xf32>
    %c88 = arith.constant 88 : index
    %c0_6 = arith.constant 0 : index
    %9 = vector.load %arg1[%c88, %c0_6] : memref<168x1024xf32, #tpu.memory_space<vmem>>, vector<1x64xf32>
    %cst_7 = arith.constant dense<0.000000e+00> : vector<8x64xf32>
    %10 = tpu.matmul %7, %8, %cst_7 {dimension_numbers = #tpu.dot_dimension_numbers<[1], [0], [0], [1], [0, 0, 1, 1], [], []>} : vector<8x64xf32>, vector<64x64xf32>, vector<8x64xf32> -> vector<8x64xf32>
    %11 = vector.broadcast %9 : vector<1x64xf32> to vector<8x64xf32>
    %12 = arith.addf %10, %11 : vector<8x64xf32>
    %cst_8 = arith.constant 0.000000e+00 : f32
    %13 = vector.broadcast %cst_8 : f32 to vector<8x64xf32>
    %14 = arith.maximumf %12, %13 : vector<8x64xf32>
    %c96 = arith.constant 96 : index
    %c0_9 = arith.constant 0 : index
    %15 = vector.load %arg1[%c96, %c0_9] : memref<168x1024xf32, #tpu.memory_space<vmem>>, vector<64x1024xf32>
    %c160 = arith.constant 160 : index
    %c0_10 = arith.constant 0 : index
    %16 = vector.load %arg1[%c160, %c0_10] : memref<168x1024xf32, #tpu.memory_space<vmem>>, vector<1x1024xf32>
    %cst_11 = arith.constant dense<0.000000e+00> : vector<8x1024xf32>
    %17 = tpu.matmul %14, %15, %cst_11 {dimension_numbers = #tpu.dot_dimension_numbers<[1], [0], [0], [1], [0, 0, 1, 1], [], []>} : vector<8x64xf32>, vector<64x1024xf32>, vector<8x1024xf32> -> vector<8x1024xf32>
    %18 = vector.broadcast %16 : vector<1x1024xf32> to vector<8x1024xf32>
    %19 = arith.addf %17, %18 : vector<8x1024xf32>
    %cst_12 = arith.constant 0.000000e+00 : f32
    %20 = vector.broadcast %cst_12 : f32 to vector<8x1024xf32>
    %21 = arith.maximumf %19, %20 : vector<8x1024xf32>
    %c0_13 = arith.constant 0 : index
    %c0_14 = arith.constant 0 : index
    %22 = vector.load %arg2[%c0_13, %c0_14] : memref<1025x9xf32, #tpu.memory_space<vmem>>, vector<1024x9xf32>
    %c1024 = arith.constant 1024 : index
    %c0_15 = arith.constant 0 : index
    %23 = vector.load %arg2[%c1024, %c0_15] : memref<1025x9xf32, #tpu.memory_space<vmem>>, vector<1x9xf32>
    %cst_16 = arith.constant dense<0.000000e+00> : vector<8x9xf32>
    %24 = tpu.matmul %21, %22, %cst_16 {dimension_numbers = #tpu.dot_dimension_numbers<[1], [0], [0], [1], [0, 0, 1, 1], [], []>} : vector<8x1024xf32>, vector<1024x9xf32>, vector<8x9xf32> -> vector<8x9xf32>
    %25 = vector.broadcast %23 : vector<1x9xf32> to vector<8x9xf32>
    %26 = arith.addf %24, %25 : vector<8x9xf32>
    %27 = vector.extract_strided_slice %26 {offsets = [0, 0], sizes = [8, 1], strides = [1, 1]} : vector<8x9xf32> to vector<8x1xf32>
    %28 = vector.extract_strided_slice %26 {offsets = [0, 1], sizes = [8, 8], strides = [1, 1]} : vector<8x9xf32> to vector<8x8xf32>
    %29 = vector.shape_cast %28 : vector<8x8xf32> to vector<1x8x8xf32>
    %cst_17 = arith.constant dense<0.000000e+00> : vector<1xf32>
    %30 = vector.multi_reduction <add>, %29, %cst_17 [1, 2] : vector<1x8x8xf32> to vector<1xf32>
    %31 = vector.shape_cast %30 : vector<1xf32> to vector<1x1x1xf32>
    %32 = vector.extract %31[0, 0, 0] : f32 from vector<1x1x1xf32>
    %cst_18 = arith.constant 6.400000e+01 : f32
    %33 = arith.divf %32, %cst_18 : f32
    %34 = vector.broadcast %33 : f32 to vector<8x8xf32>
    %35 = arith.subf %28, %34 : vector<8x8xf32>
    %36 = vector.broadcast %27 : vector<8x1xf32> to vector<8x8xf32>
    %37 = arith.addf %36, %35 : vector<8x8xf32>
    %c0_19 = arith.constant 0 : index
    %c0_20 = arith.constant 0 : index
    %38 = vector.load %arg3[%c0_19, %c0_20] : memref<8x8xf32, #tpu.memory_space<vmem>>, vector<8x8xf32>
    tpu.vector_store %arg3[%c0_19, %c0_20], %37 {strides = array<i32>} : memref<8x8xf32, #tpu.memory_space<vmem>>, vector<8x8xf32>,
    return
  }
}

</mosaic_0001>

<llo_original>
// kernel: tpu_custom_call.1
$region0: #{tpu_custom_call.1}
  #allocation0 [shape = 'u32[]', space=smem, size = 0x4, offset = 0x4, fixed_abs, tag = 'smem constant byte address 0x4 - core index']
  #allocation1 [shape = 'u32[72,128]{1,0:T(1,128)}', space=vmem, size = 0x9000, scoped, tag = 'internal scratch']
  %s0 = inlined_call_operand.vmem [shape: f32[8,16], index: 0, kind: input, shape index: {}]
  %s1 = inlined_call_operand.hbm [shape: f32[168,1024], index: 1, kind: input, shape index: {}]
  %s2 = inlined_call_operand.vmem [shape: f32[1025,9], index: 2, kind: input, shape index: {}]
  %s3 = inlined_call_operand.hbm [shape: f32[8,8], index: 3, kind: output, shape index: {}]
  %s4 = sld [smem:[#allocation0]]
  $region26: #{tpu_custom_call.1} parent=0
    _
  %s6 = ssub.s32 1, %s4
  %s7 = scalar_select 0, %s6, %s4
  $region1: #{tpu_custom_call.1} parent=0
    #allocation2 [shape = 'u8[688128]{0}', space=vmem, size = 0xa8000, scoped, tag = 'input window, operand 1, single buffered']
    #allocation3 [shape = 's32[1]{0}', space=sflag, size = 0x4, scoped, tag = 'scoped memory for tpu_custom_call.1']
    #allocation4 [shape = 's32[1]{0}', space=sflag, size = 0x4, scoped, tag = 'scoped memory for tpu_custom_call.1']
    #allocation5 [shape = 'u8[4096]{0}', space=vmem, size = 0x1000, scoped, tag = 'output window, operand 0, single buffered']
    %8 = vsyncpa [#allocation3], 0
    %9 = vsyncpa [#allocation4], 0
    // Predicated region
    $region2: #{tpu_custom_call.1} parent=1 // pred_check
      _
    $region3: #{tpu_custom_call.1} parent=1 // pred_check_branch
      %11 = sbr.rel (0) target = $region5
    $region4: #{tpu_custom_call.1} parent=1 // pred_region
      _
    $region5: #{tpu_custom_call.1} parent=1 // pred_fallthru
      _
    // Predicated region
    $region6: #{tpu_custom_call.1} parent=1 // pred_check
      _
    $region7: #{tpu_custom_call.1} parent=1 // pred_check_branch
      %13 = sbr.rel (0) target = $region9
    $region8: #{tpu_custom_call.1} parent=1 // pred_region
      %15 = vsyncadd [#allocation3], 0
      %s16 = sshll.u32 %s1, 4
      %s17 = int_to_ptr.hbm [resolvable:$true] %s16
      %s18 = sshll.u32 [#allocation2], 4
      %s19 = int_to_ptr.vmem [resolvable:$true] %s18
      %24 = dma.hbm_to_vmem [thread:$0]  %s17, 21504, %s19, [#allocation3], 1024, 1024, 64
    $region9: #{tpu_custom_call.1} parent=1 // pred_fallthru
      _
    // Predicated region
    $region10: #{tpu_custom_call.1} parent=1 // pred_check
      _
    $region11: #{tpu_custom_call.1} parent=1 // pred_check_branch
      %26 = sbr.rel (0) target = $region13
    $region12: #{tpu_custom_call.1} parent=1 // pred_region
      _
    $region13: #{tpu_custom_call.1} parent=1 // pred_fallthru
      _
    // Predicated region
    $region14: #{tpu_custom_call.1} parent=1 // pred_check
      _
    $region15: #{tpu_custom_call.1} parent=1 // pred_check_branch
      %28 = sbr.rel (0) target = $region17
    $region16: #{tpu_custom_call.1} parent=1 // pred_region
      %30 = dma.done [#allocation3], 21504
    $region17: #{tpu_custom_call.1} parent=1 // pred_fallthru
      _
    %v31 = vld [vmem:[%s0] sm:$0xff]
    %v32 = vld [vmem:[#allocation2] sm:$0xff]
    %v33 = vld [vmem:[#allocation2 + $0x40] sm:$0xff]
    %v34 = vld [vmem:[#allocation2 + $0x80] ss:$0 sm:$0xff]
    %vm35 = vcmask 130048
    %v37 = vsel %vm35, %v31, 0
    %39 = vmatpush.msra.mxu0 0.0
    %40 = vmatpush.msra.mxu0 0.0
    %41 = vmatpush.msra.mxu0 0.0
    %42 = vmatpush.msra.mxu0 0.0
    %43 = vmatpush.msra.mxu0 0.0
    %44 = vmatpush.msra.mxu0 0.0
    %45 = vmatpush.msra.mxu0 0.0
    %46 = vmatpush.msra.mxu0 0.0
    %47 = vmatpush.msra.mxu0 0.0
    %48 = vmatpush.msra.mxu0 0.0
    %49 = vmatpush.msra.mxu0 0.0
    %50 = vmatpush.msra.mxu0 0.0
    %51 = vmatpush.msra.mxu0 0.0
    %52 = vmatpush.msra.mxu0 0.0
    %53 = vmatpush.msra.mxu0 %v33
    %54 = vmatpush.msra.mxu0 %v32
    %55 = vmatmul.f32.gmra.mxu0 %v37
    %v56 = vpop.f32.mrf.mxu0
    %v57 = vadd.f32 %v34, %v56
    %58 = vdwg.mxu0
    %v59 = vmax.f32 %v57, 0.0
    %v60 = vld [vmem:[#allocation2 + $0xc0] sm:$0xff]
    %v61 = vld [vmem:[#allocation2 + $0x100] sm:$0xff]
    %v62 = vld [vmem:[#allocation2 + $0x140] sm:$0xff]
    %v63 = vld [vmem:[#allocation2 + $0x180] sm:$0xff]
    %v64 = vld [vmem:[#allocation2 + $0x1c0] sm:$0xff]
    %v65 = vld [vmem:[#allocation2 + $0x200] sm:$0xff]
    %v66 = vld [vmem:[#allocation2 + $0x240] sm:$0xff]
    %v67 = vld [vmem:[#allocation2 + $0x280] sm:$0xff]
    %v68 = vld [vmem:[#allocation2 + $0x2c0] ss:$0 sm:$0xff]
    %vm69 = vcmask 523264
    %v71 = vsel %vm69, %v59, 0
    %73 = vmatpush.msra.mxu0 0.0
    %74 = vmatpush.msra.mxu0 0.0
    %75 = vmatpush.msra.mxu0 0.0
    %76 = vmatpush.msra.mxu0 0.0
    %77 = vmatpush.msra.mxu0 0.0
    %78 = vmatpush.msra.mxu0 0.0
    %79 = vmatpush.msra.mxu0 0.0
    %80 = vmatpush.msra.mxu0 0.0
    %81 = vmatpush.msra.mxu0 %v67
    %82 = vmatpush.msra.mxu0 %v66
    %83 = vmatpush.msra.mxu0 %v65
    %84 = vmatpush.msra.mxu0 %v64
    %85 = vmatpush.msra.mxu0 %v63
    %86 = vmatpush.msra.mxu0 %v62
    %87 = vmatpush.msra.mxu0 %v61
    %88 = vmatpush.msra.mxu0 %v60
    %89 = vmatmul.f32.gmra.mxu0 %v71
    %v90 = vpop.f32.mrf.mxu0
    %v91 = vadd.f32 %v68, %v90
    %92 = vdwg.mxu0
    %v93 = vmax.f32 %v91, 0.0
    %v94 = vld [vmem:[#allocation2 + $0x300] sm:$0xff]
    %v95 = vld [vmem:[#allocation2 + $0x308] sm:$0xff]
    %v96 = vld [vmem:[#allocation2 + $0x310] sm:$0xff]
    %v97 = vld [vmem:[#allocation2 + $0x318] sm:$0xff]
    %v98 = vld [vmem:[#allocation2 + $0x320] sm:$0xff]
    %v99 = vld [vmem:[#allocation2 + $0x328] sm:$0xff]
    %v100 = vld [vmem:[#allocation2 + $0x330] sm:$0xff]
    %v101 = vld [vmem:[#allocation2 + $0x338] sm:$0xff]
    %v102 = vld [vmem:[#allocation2 + $0x340] sm:$0xff]
    %v103 = vld [vmem:[#allocation2 + $0x348] sm:$0xff]
    %v104 = vld [vmem:[#allocation2 + $0x350] sm:$0xff]
    %v105 = vld [vmem:[#allocation2 + $0x358] sm:$0xff]
    %v106 = vld [vmem:[#allocation2 + $0x360] sm:$0xff]
    %v107 = vld [vmem:[#allocation2 + $0x368] sm:$0xff]
    %v108 = vld [vmem:[#allocation2 + $0x370] sm:$0xff]
    %v109 = vld [vmem:[#allocation2 + $0x378] sm:$0xff]
    %v110 = vld [vmem:[#allocation2 + $0x380] sm:$0xff]
    %v111 = vld [vmem:[#allocation2 + $0x388] sm:$0xff]
    %v112 = vld [vmem:[#allocation2 + $0x390] sm:$0xff]
    %v113 = vld [vmem:[#allocation2 + $0x398] sm:$0xff]
    %v114 = vld [vmem:[#allocation2 + $0x3a0] sm:$0xff]
    %v115 = vld [vmem:[#allocation2 + $0x3a8] sm:$0xff]
    %v116 = vld [vmem:[#allocation2 + $0x3b0] sm:$0xff]
    %v117 = vld [vmem:[#allocation2 + $0x3b8] sm:$0xff]
    %v118 = vld [vmem:[#allocation2 + $0x3c0] sm:$0xff]
    %v119 = vld [vmem:[#allocation2 + $0x3c8] sm:$0xff]
    %v120 = vld [vmem:[#allocation2 + $0x3d0] sm:$0xff]
    %v121 = vld [vmem:[#allocation2 + $0x3d8] sm:$0xff]
    %v122 = vld [vmem:[#allocation2 + $0x3e0] sm:$0xff]
    %v123 = vld [vmem:[#allocation2 + $0x3e8] sm:$0xff]
    %v124 = vld [vmem:[#allocation2 + $0x3f0] sm:$0xff]
    %v125 = vld [vmem:[#allocation2 + $0x3f8] sm:$0xff]
    %v126 = vld [vmem:[#allocation2 + $0x400] sm:$0xff]
    %v127 = vld [vmem:[#allocation2 + $0x408] sm:$0xff]
    %v128 = vld [vmem:[#allocation2 + $0x410] sm:$0xff]
    %v129 = vld [vmem:[#allocation2 + $0x418] sm:$0xff]
    %v130 = vld [vmem:[#allocation2 + $0x420] sm:$0xff]
    %v131 = vld [vmem:[#allocation2 + $0x428] sm:$0xff]
    %v132 = vld [vmem:[#allocation2 + $0x430] sm:$0xff]
    %v133 = vld [vmem:[#allocation2 + $0x438] sm:$0xff]
    %v134 = vld [vmem:[#allocation2 + $0x440] sm:$0xff]
    %v135 = vld [vmem:[#allocation2 + $0x448] sm:$0xff]
    %v136 = vld [vmem:[#allocation2 + $0x450] sm:$0xff]
    %v137 = vld [vmem:[#allocation2 + $0x458] sm:$0xff]
    %v138 = vld [vmem:[#allocation2 + $0x460] sm:$0xff]
    %v139 = vld [vmem:[#allocation2 + $0x468] sm:$0xff]
    %v140 = vld [vmem:[#allocation2 + $0x470] sm:$0xff]
    %v141 = vld [vmem:[#allocation2 + $0x478] sm:$0xff]
    %v142 = vld [vmem:[#allocation2 + $0x480] sm:$0xff]
    %v143 = vld [vmem:[#allocation2 + $0x488] sm:$0xff]
    %v144 = vld [vmem:[#allocation2 + $0x490] sm:$0xff]
    %v145 = vld [vmem:[#allocation2 + $0x498] sm:$0xff]
    %v146 = vld [vmem:[#allocation2 + $0x4a0] sm:$0xff]
    %v147 = vld [vmem:[#allocation2 + $0x4a8] sm:$0xff]
    %v148 = vld [vmem:[#allocation2 + $0x4b0] sm:$0xff]
    %v149 = vld [vmem:[#allocation2 + $0x4b8] sm:$0xff]
    %v150 = vld [vmem:[#allocation2 + $0x4c0] sm:$0xff]
    %v151 = vld [vmem:[#allocation2 + $0x4c8] sm:$0xff]
    %v152 = vld [vmem:[#allocation2 + $0x4d0] sm:$0xff]
    %v153 = vld [vmem:[#allocation2 + $0x4d8] sm:$0xff]
    %v154 = vld [vmem:[#allocation2 + $0x4e0] sm:$0xff]
    %v155 = vld [vmem:[#allocation2 + $0x4e8] sm:$0xff]
    %v156 = vld [vmem:[#allocation2 + $0x4f0] sm:$0xff]
    %v157 = vld [vmem:[#allocation2 + $0x4f8] sm:$0xff]
    %s158 = scalar_lea.vmem [#allocation2], 1280
    %v159 = vld [vmem:[%s158] ss:$8 sm:$0xf]
    %v160 = vld [vmem:[%s158] ss:$8 sm:$0xf0]
    %v161 = vor.u32 %v159, %v160
    %v163 = vperm.slane %v161, 0
    %v164 = vperm.slane %v161, 1
    %v165 = vperm.slane %v161, 2
    %v166 = vperm.slane %v161, 3
    %v167 = vperm.slane %v161, 4
    %v168 = vperm.slane %v161, 5
    %v169 = vperm.slane %v161, 6
    %v170 = vperm.slane %v161, 7
    %v180 = vsel %vm69, %v93, 0
    %182 = vmatpush.msra.mxu0 0.0
    %183 = vmatpush.msra.mxu0 0.0
    %184 = vmatpush.msra.mxu0 0.0
    %185 = vmatpush.msra.mxu0 0.0
    %186 = vmatpush.msra.mxu0 0.0
    %187 = vmatpush.msra.mxu0 0.0
    %188 = vmatpush.msra.mxu0 0.0
    %189 = vmatpush.msra.mxu0 0.0
    %190 = vmatpush.msra.mxu0 %v150
    %191 = vmatpush.msra.mxu0 %v142
    %192 = vmatpush.msra.mxu0 %v134
    %193 = vmatpush.msra.mxu0 %v126
    %194 = vmatpush.msra.mxu0 %v118
    %195 = vmatpush.msra.mxu0 %v110
    %196 = vmatpush.msra.mxu0 %v102
    %197 = vmatpush.msra.mxu0 %v94
    %198 = vmatmul.f32.gmra.mxu0 %v180
    %v199 = vpop.f32.mrf.mxu0
    %v200 = vadd.f32 %v163, %v199
    %201 = vdwg.mxu0
    %202 = vmatpush.msra.mxu0 0.0
    %203 = vmatpush.msra.mxu0 0.0
    %204 = vmatpush.msra.mxu0 0.0
    %205 = vmatpush.msra.mxu0 0.0
    %206 = vmatpush.msra.mxu0 0.0
    %207 = vmatpush.msra.mxu0 0.0
    %208 = vmatpush.msra.mxu0 0.0
    %209 = vmatpush.msra.mxu0 0.0
    %210 = vmatpush.msra.mxu0 %v151
    %211 = vmatpush.msra.mxu0 %v143
    %212 = vmatpush.msra.mxu0 %v135
    %213 = vmatpush.msra.mxu0 %v127
    %214 = vmatpush.msra.mxu0 %v119
    %215 = vmatpush.msra.mxu0 %v111
    %216 = vmatpush.msra.mxu0 %v103
    %217 = vmatpush.msra.mxu0 %v95
    %218 = vmatmul.f32.gmra.mxu0 %v180
    %v219 = vpop.f32.mrf.mxu0
    %v220 = vadd.f32 %v164, %v219
    %221 = vdwg.mxu0
    %222 = vmatpush.msra.mxu0 0.0
    %223 = vmatpush.msra.mxu0 0.0
    %224 = vmatpush.msra.mxu0 0.0
    %225 = vmatpush.msra.mxu0 0.0
    %226 = vmatpush.msra.mxu0 0.0
    %227 = vmatpush.msra.mxu0 0.0
    %228 = vmatpush.msra.mxu0 0.0
    %229 = vmatpush.msra.mxu0 0.0
    %230 = vmatpush.msra.mxu0 %v152
    %231 = vmatpush.msra.mxu0 %v144
    %232 = vmatpush.msra.mxu0 %v136
    %233 = vmatpush.msra.mxu0 %v128
    %234 = vmatpush.msra.mxu0 %v120
    %235 = vmatpush.msra.mxu0 %v112
    %236 = vmatpush.msra.mxu0 %v104
    %237 = vmatpush.msra.mxu0 %v96
    %238 = vmatmul.f32.gmra.mxu0 %v180
    %v239 = vpop.f32.mrf.mxu0
    %v240 = vadd.f32 %v165, %v239
    %241 = vdwg.mxu0
    %242 = vmatpush.msra.mxu0 0.0
    %243 = vmatpush.msra.mxu0 0.0
    %244 = vmatpush.msra.mxu0 0.0
    %245 = vmatpush.msra.mxu0 0.0
    %246 = vmatpush.msra.mxu0 0.0
    %247 = vmatpush.msra.mxu0 0.0
    %248 = vmatpush.msra.mxu0 0.0
    %249 = vmatpush.msra.mxu0 0.0
    %250 = vmatpush.msra.mxu0 %v153
    %251 = vmatpush.msra.mxu0 %v145
    %252 = vmatpush.msra.mxu0 %v137
    %253 = vmatpush.msra.mxu0 %v129
    %254 = vmatpush.msra.mxu0 %v121
    %255 = vmatpush.msra.mxu0 %v113
    %256 = vmatpush.msra.mxu0 %v105
    %257 = vmatpush.msra.mxu0 %v97
    %258 = vmatmul.f32.gmra.mxu0 %v180
    %v259 = vpop.f32.mrf.mxu0
    %v260 = vadd.f32 %v166, %v259
    %261 = vdwg.mxu0
    %262 = vmatpush.msra.mxu0 0.0
    %263 = vmatpush.msra.mxu0 0.0
    %264 = vmatpush.msra.mxu0 0.0
    %265 = vmatpush.msra.mxu0 0.0
    %266 = vmatpush.msra.mxu0 0.0
    %267 = vmatpush.msra.mxu0 0.0
    %268 = vmatpush.msra.mxu0 0.0
    %269 = vmatpush.msra.mxu0 0.0
    %270 = vmatpush.msra.mxu0 %v154
    %271 = vmatpush.msra.mxu0 %v146
    %272 = vmatpush.msra.mxu0 %v138
    %273 = vmatpush.msra.mxu0 %v130
    %274 = vmatpush.msra.mxu0 %v122
    %275 = vmatpush.msra.mxu0 %v114
    %276 = vmatpush.msra.mxu0 %v106
    %277 = vmatpush.msra.mxu0 %v98
    %278 = vmatmul.f32.gmra.mxu0 %v180
    %v279 = vpop.f32.mrf.mxu0
    %v280 = vadd.f32 %v167, %v279
    %281 = vdwg.mxu0
    %282 = vmatpush.msra.mxu0 0.0
    %283 = vmatpush.msra.mxu0 0.0
    %284 = vmatpush.msra.mxu0 0.0
    %285 = vmatpush.msra.mxu0 0.0
    %286 = vmatpush.msra.mxu0 0.0
    %287 = vmatpush.msra.mxu0 0.0
    %288 = vmatpush.msra.mxu0 0.0
    %289 = vmatpush.msra.mxu0 0.0
    %290 = vmatpush.msra.mxu0 %v155
    %291 = vmatpush.msra.mxu0 %v147
    %292 = vmatpush.msra.mxu0 %v139
    %293 = vmatpush.msra.mxu0 %v131
    %294 = vmatpush.msra.mxu0 %v123
    %295 = vmatpush.msra.mxu0 %v115
    %296 = vmatpush.msra.mxu0 %v107
    %297 = vmatpush.msra.mxu0 %v99
    %298 = vmatmul.f32.gmra.mxu0 %v180
    %v299 = vpop.f32.mrf.mxu0
    %v300 = vadd.f32 %v168, %v299
    %301 = vdwg.mxu0
    %302 = vmatpush.msra.mxu0 0.0
    %303 = vmatpush.msra.mxu0 0.0
    %304 = vmatpush.msra.mxu0 0.0
    %305 = vmatpush.msra.mxu0 0.0
    %306 = vmatpush.msra.mxu0 0.0
    %307 = vmatpush.msra.mxu0 0.0
    %308 = vmatpush.msra.mxu0 0.0
    %309 = vmatpush.msra.mxu0 0.0
    %310 = vmatpush.msra.mxu0 %v156
    %311 = vmatpush.msra.mxu0 %v148
    %312 = vmatpush.msra.mxu0 %v140
    %313 = vmatpush.msra.mxu0 %v132
    %314 = vmatpush.msra.mxu0 %v124
    %315 = vmatpush.msra.mxu0 %v116
    %316 = vmatpush.msra.mxu0 %v108
    %317 = vmatpush.msra.mxu0 %v100
    %318 = vmatmul.f32.gmra.mxu0 %v180
    %v319 = vpop.f32.mrf.mxu0
    %v320 = vadd.f32 %v169, %v319
    %321 = vdwg.mxu0
    %322 = vmatpush.msra.mxu0 0.0
    %323 = vmatpush.msra.mxu0 0.0
    %324 = vmatpush.msra.mxu0 0.0
    %325 = vmatpush.msra.mxu0 0.0
    %326 = vmatpush.msra.mxu0 0.0
    %327 = vmatpush.msra.mxu0 0.0
    %328 = vmatpush.msra.mxu0 0.0
    %329 = vmatpush.msra.mxu0 0.0
    %330 = vmatpush.msra.mxu0 %v157
    %331 = vmatpush.msra.mxu0 %v149
    %332 = vmatpush.msra.mxu0 %v141
    %333 = vmatpush.msra.mxu0 %v133
    %334 = vmatpush.msra.mxu0 %v125
    %335 = vmatpush.msra.mxu0 %v117
    %336 = vmatpush.msra.mxu0 %v109
    %337 = vmatpush.msra.mxu0 %v101
    %338 = vmatmul.f32.gmra.mxu0 %v180
    %v339 = vpop.f32.mrf.mxu0
    %v340 = vadd.f32 %v170, %v339
    %341 = vdwg.mxu0
    %v342 = vmax.f32 %v200, 0.0
    %v343 = vmax.f32 %v220, 0.0
    %v344 = vmax.f32 %v240, 0.0
    %v345 = vmax.f32 %v260, 0.0
    %v346 = vmax.f32 %v280, 0.0
    %v347 = vmax.f32 %v300, 0.0
    %v348 = vmax.f32 %v320, 0.0
    %v349 = vmax.f32 %v340, 0.0
    %v350 = vld [vmem:[%s2] sm:$0xff]
    %v351 = vld [vmem:[%s2 + $0x8] sm:$0xff]
    %v352 = vld [vmem:[%s2 + $0x10] sm:$0xff]
    %v353 = vld [vmem:[%s2 + $0x18] sm:$0xff]
    %v354 = vld [vmem:[%s2 + $0x20] sm:$0xff]
    %v355 = vld [vmem:[%s2 + $0x28] sm:$0xff]
    %v356 = vld [vmem:[%s2 + $0x30] sm:$0xff]
    %v357 = vld [vmem:[%s2 + $0x38] sm:$0xff]
    %v358 = vld [vmem:[%s2 + $0x40] sm:$0xff]
    %v359 = vld [vmem:[%s2 + $0x48] sm:$0xff]
    %v360 = vld [vmem:[%s2 + $0x50] sm:$0xff]
    %v361 = vld [vmem:[%s2 + $0x58] sm:$0xff]
    %v362 = vld [vmem:[%s2 + $0x60] sm:$0xff]
    %v363 = vld [vmem:[%s2 + $0x68] sm:$0xff]
    %v364 = vld [vmem:[%s2 + $0x70] sm:$0xff]
    %v365 = vld [vmem:[%s2 + $0x78] sm:$0xff]
    %v366 = vld [vmem:[%s2 + $0x80] sm:$0xff]
    %v367 = vld [vmem:[%s2 + $0x88] sm:$0xff]
    %v368 = vld [vmem:[%s2 + $0x90] sm:$0xff]
    %v369 = vld [vmem:[%s2 + $0x98] sm:$0xff]
    %v370 = vld [vmem:[%s2 + $0xa0] sm:$0xff]
    %v371 = vld [vmem:[%s2 + $0xa8] sm:$0xff]
    %v372 = vld [vmem:[%s2 + $0xb0] sm:$0xff]
    %v373 = vld [vmem:[%s2 + $0xb8] sm:$0xff]
    %v374 = vld [vmem:[%s2 + $0xc0] sm:$0xff]
    %v375 = vld [vmem:[%s2 + $0xc8] sm:$0xff]
    %v376 = vld [vmem:[%s2 + $0xd0] sm:$0xff]
    %v377 = vld [vmem:[%s2 + $0xd8] sm:$0xff]
    %v378 = vld [vmem:[%s2 + $0xe0] sm:$0xff]
    %v379 = vld [vmem:[%s2 + $0xe8] sm:$0xff]
    %v380 = vld [vmem:[%s2 + $0xf0] sm:$0xff]
    %v381 = vld [vmem:[%s2 + $0xf8] sm:$0xff]
    %v382 = vld [vmem:[%s2 + $0x100] sm:$0xff]
    %v383 = vld [vmem:[%s2 + $0x108] sm:$0xff]
    %v384 = vld [vmem:[%s2 + $0x110] sm:$0xff]
    %v385 = vld [vmem:[%s2 + $0x118] sm:$0xff]
    %v386 = vld [vmem:[%s2 + $0x120] sm:$0xff]
    %v387 = vld [vmem:[%s2 + $0x128] sm:$0xff]
    %v388 = vld [vmem:[%s2 + $0x130] sm:$0xff]
    %v389 = vld [vmem:[%s2 + $0x138] sm:$0xff]
    %v390 = vld [vmem:[%s2 + $0x140] sm:$0xff]
    %v391 = vld [vmem:[%s2 + $0x148] sm:$0xff]
    %v392 = vld [vmem:[%s2 + $0x150] sm:$0xff]
    %v393 = vld [vmem:[%s2 + $0x158] sm:$0xff]
    %v394 = vld [vmem:[%s2 + $0x160] sm:$0xff]
    %v395 = vld [vmem:[%s2 + $0x168] sm:$0xff]
    %v396 = vld [vmem:[%s2 + $0x170] sm:$0xff]
    %v397 = vld [vmem:[%s2 + $0x178] sm:$0xff]
    %v398 = vld [vmem:[%s2 + $0x180] sm:$0xff]
    %v399 = vld [vmem:[%s2 + $0x188] sm:$0xff]
    %v400 = vld [vmem:[%s2 + $0x190] sm:$0xff]
    %v401 = vld [vmem:[%s2 + $0x198] sm:$0xff]
    %v402 = vld [vmem:[%s2 + $0x1a0] sm:$0xff]
    %v403 = vld [vmem:[%s2 + $0x1a8] sm:$0xff]
    %v404 = vld [vmem:[%s2 + $0x1b0] sm:$0xff]
    %v405 = vld [vmem:[%s2 + $0x1b8] sm:$0xff]
    %v406 = vld [vmem:[%s2 + $0x1c0] sm:$0xff]
    %v407 = vld [vmem:[%s2 + $0x1c8] sm:$0xff]
    %v408 = vld [vmem:[%s2 + $0x1d0] sm:$0xff]
    %v409 = vld [vmem:[%s2 + $0x1d8] sm:$0xff]
    %v410 = vld [vmem:[%s2 + $0x1e0] sm:$0xff]
    %v411 = vld [vmem:[%s2 + $0x1e8] sm:$0xff]
    %v412 = vld [vmem:[%s2 + $0x1f0] sm:$0xff]
    %v413 = vld [vmem:[%s2 + $0x1f8] sm:$0xff]
    %v414 = vld [vmem:[%s2 + $0x200] sm:$0xff]
    %v415 = vld [vmem:[%s2 + $0x208] sm:$0xff]
    %v416 = vld [vmem:[%s2 + $0x210] sm:$0xff]
    %v417 = vld [vmem:[%s2 + $0x218] sm:$0xff]
    %v418 = vld [vmem:[%s2 + $0x220] sm:$0xff]
    %v419 = vld [vmem:[%s2 + $0x228] sm:$0xff]
    %v420 = vld [vmem:[%s2 + $0x230] sm:$0xff]
    %v421 = vld [vmem:[%s2 + $0x238] sm:$0xff]
    %v422 = vld [vmem:[%s2 + $0x240] sm:$0xff]
    %v423 = vld [vmem:[%s2 + $0x248] sm:$0xff]
    %v424 = vld [vmem:[%s2 + $0x250] sm:$0xff]
    %v425 = vld [vmem:[%s2 + $0x258] sm:$0xff]
    %v426 = vld [vmem:[%s2 + $0x260] sm:$0xff]
    %v427 = vld [vmem:[%s2 + $0x268] sm:$0xff]
    %v428 = vld [vmem:[%s2 + $0x270] sm:$0xff]
    %v429 = vld [vmem:[%s2 + $0x278] sm:$0xff]
    %v430 = vld [vmem:[%s2 + $0x280] sm:$0xff]
    %v431 = vld [vmem:[%s2 + $0x288] sm:$0xff]
    %v432 = vld [vmem:[%s2 + $0x290] sm:$0xff]
    %v433 = vld [vmem:[%s2 + $0x298] sm:$0xff]
    %v434 = vld [vmem:[%s2 + $0x2a0] sm:$0xff]
    %v435 = vld [vmem:[%s2 + $0x2a8] sm:$0xff]
    %v436 = vld [vmem:[%s2 + $0x2b0] sm:$0xff]
    %v437 = vld [vmem:[%s2 + $0x2b8] sm:$0xff]
    %v438 = vld [vmem:[%s2 + $0x2c0] sm:$0xff]
    %v439 = vld [vmem:[%s2 + $0x2c8] sm:$0xff]
    %v440 = vld [vmem:[%s2 + $0x2d0] sm:$0xff]
    %v441 = vld [vmem:[%s2 + $0x2d8] sm:$0xff]
    %v442 = vld [vmem:[%s2 + $0x2e0] sm:$0xff]
    %v443 = vld [vmem:[%s2 + $0x2e8] sm:$0xff]
    %v444 = vld [vmem:[%s2 + $0x2f0] sm:$0xff]
    %v445 = vld [vmem:[%s2 + $0x2f8] sm:$0xff]
    %v446 = vld [vmem:[%s2 + $0x300] sm:$0xff]
    %v447 = vld [vmem:[%s2 + $0x308] sm:$0xff]
    %v448 = vld [vmem:[%s2 + $0x310] sm:$0xff]
    %v449 = vld [vmem:[%s2 + $0x318] sm:$0xff]
    %v450 = vld [vmem:[%s2 + $0x320] sm:$0xff]
    %v451 = vld [vmem:[%s2 + $0x328] sm:$0xff]
    %v452 = vld [vmem:[%s2 + $0x330] sm:$0xff]
    %v453 = vld [vmem:[%s2 + $0x338] sm:$0xff]
    %v454 = vld [vmem:[%s2 + $0x340] sm:$0xff]
    %v455 = vld [vmem:[%s2 + $0x348] sm:$0xff]
    %v456 = vld [vmem:[%s2 + $0x350] sm:$0xff]
    %v457 = vld [vmem:[%s2 + $0x358] sm:$0xff]
    %v458 = vld [vmem:[%s2 + $0x360] sm:$0xff]
    %v459 = vld [vmem:[%s2 + $0x368] sm:$0xff]
    %v460 = vld [vmem:[%s2 + $0x370] sm:$0xff]
    %v461 = vld [vmem:[%s2 + $0x378] sm:$0xff]
    %v462 = vld [vmem:[%s2 + $0x380] sm:$0xff]
    %v463 = vld [vmem:[%s2 + $0x388] sm:$0xff]
    %v464 = vld [vmem:[%s2 + $0x390] sm:$0xff]
    %v465 = vld [vmem:[%s2 + $0x398] sm:$0xff]
    %v466 = vld [vmem:[%s2 + $0x3a0] sm:$0xff]
    %v467 = vld [vmem:[%s2 + $0x3a8] sm:$0xff]
    %v468 = vld [vmem:[%s2 + $0x3b0] sm:$0xff]
    %v469 = vld [vmem:[%s2 + $0x3b8] sm:$0xff]
    %v470 = vld [vmem:[%s2 + $0x3c0] sm:$0xff]
    %v471 = vld [vmem:[%s2 + $0x3c8] sm:$0xff]
    %v472 = vld [vmem:[%s2 + $0x3d0] sm:$0xff]
    %v473 = vld [vmem:[%s2 + $0x3d8] sm:$0xff]
    %v474 = vld [vmem:[%s2 + $0x3e0] sm:$0xff]
    %v475 = vld [vmem:[%s2 + $0x3e8] sm:$0xff]
    %v476 = vld [vmem:[%s2 + $0x3f0] sm:$0xff]
    %v477 = vld [vmem:[%s2 + $0x3f8] sm:$0xff]
    %v478 = vld [vmem:[%s2 + $0x400] sm:$0x1]
    %v479 = vperm.slane %v478, 0
    %480 = vmatpush.msra.mxu0 %v365
    %481 = vmatpush.msra.mxu0 %v364
    %482 = vmatpush.msra.mxu0 %v363
    %483 = vmatpush.msra.mxu0 %v362
    %484 = vmatpush.msra.mxu0 %v361
    %485 = vmatpush.msra.mxu0 %v360
    %486 = vmatpush.msra.mxu0 %v359
    %487 = vmatpush.msra.mxu0 %v358
    %488 = vmatpush.msra.mxu0 %v357
    %489 = vmatpush.msra.mxu0 %v356
    %490 = vmatpush.msra.mxu0 %v355
    %491 = vmatpush.msra.mxu0 %v354
    %492 = vmatpush.msra.mxu0 %v353
    %493 = vmatpush.msra.mxu0 %v352
    %494 = vmatpush.msra.mxu0 %v351
    %495 = vmatpush.msra.mxu0 %v350
    %496 = vmatmul.f32.gmra.mxu0 %v342
    %v497 = vpop.f32.mrf.mxu0
    %v498 = vadd.f32 %v479, %v497
    %499 = vdwg.mxu0
    %500 = vmatpush.msra.mxu0 %v381
    %501 = vmatpush.msra.mxu0 %v380
    %502 = vmatpush.msra.mxu0 %v379
    %503 = vmatpush.msra.mxu0 %v378
    %504 = vmatpush.msra.mxu0 %v377
    %505 = vmatpush.msra.mxu0 %v376
    %506 = vmatpush.msra.mxu0 %v375
    %507 = vmatpush.msra.mxu0 %v374
    %508 = vmatpush.msra.mxu0 %v373
    %509 = vmatpush.msra.mxu0 %v372
    %510 = vmatpush.msra.mxu0 %v371
    %511 = vmatpush.msra.mxu0 %v370
    %512 = vmatpush.msra.mxu0 %v369
    %513 = vmatpush.msra.mxu0 %v368
    %514 = vmatpush.msra.mxu0 %v367
    %515 = vmatpush.msra.mxu0 %v366
    %516 = vmatmul.f32.gmra.mxu0 %v343
    %v517 = vpop.f32.mrf.mxu0
    %v518 = vadd.f32 %v498, %v517
    %519 = vdwg.mxu0
    %520 = vmatpush.msra.mxu0 %v397
    %521 = vmatpush.msra.mxu0 %v396
    %522 = vmatpush.msra.mxu0 %v395
    %523 = vmatpush.msra.mxu0 %v394
    %524 = vmatpush.msra.mxu0 %v393
    %525 = vmatpush.msra.mxu0 %v392
    %526 = vmatpush.msra.mxu0 %v391
    %527 = vmatpush.msra.mxu0 %v390
    %528 = vmatpush.msra.mxu0 %v389
    %529 = vmatpush.msra.mxu0 %v388
    %530 = vmatpush.msra.mxu0 %v387
    %531 = vmatpush.msra.mxu0 %v386
    %532 = vmatpush.msra.mxu0 %v385
    %533 = vmatpush.msra.mxu0 %v384
    %534 = vmatpush.msra.mxu0 %v383
    %535 = vmatpush.msra.mxu0 %v382
    %536 = vmatmul.f32.gmra.mxu0 %v344
    %v537 = vpop.f32.mrf.mxu0
    %v538 = vadd.f32 %v518, %v537
    %539 = vdwg.mxu0
    %540 = vmatpush.msra.mxu0 %v413
    %541 = vmatpush.msra.mxu0 %v412
    %542 = vmatpush.msra.mxu0 %v411
    %543 = vmatpush.msra.mxu0 %v410
    %544 = vmatpush.msra.mxu0 %v409
    %545 = vmatpush.msra.mxu0 %v408
    %546 = vmatpush.msra.mxu0 %v407
    %547 = vmatpush.msra.mxu0 %v406
    %548 = vmatpush.msra.mxu0 %v405
    %549 = vmatpush.msra.mxu0 %v404
    %550 = vmatpush.msra.mxu0 %v403
    %551 = vmatpush.msra.mxu0 %v402
    %552 = vmatpush.msra.mxu0 %v401
    %553 = vmatpush.msra.mxu0 %v400
    %554 = vmatpush.msra.mxu0 %v399
    %555 = vmatpush.msra.mxu0 %v398
    %556 = vmatmul.f32.gmra.mxu0 %v345
    %v557 = vpop.f32.mrf.mxu0
    %v558 = vadd.f32 %v538, %v557
    %559 = vdwg.mxu0
    %560 = vmatpush.msra.mxu0 %v429
    %561 = vmatpush.msra.mxu0 %v428
    %562 = vmatpush.msra.mxu0 %v427
    %563 = vmatpush.msra.mxu0 %v426
    %564 = vmatpush.msra.mxu0 %v425
    %565 = vmatpush.msra.mxu0 %v424
    %566 = vmatpush.msra.mxu0 %v423
    %567 = vmatpush.msra.mxu0 %v422
    %568 = vmatpush.msra.mxu0 %v421
    %569 = vmatpush.msra.mxu0 %v420
    %570 = vmatpush.msra.mxu0 %v419
    %571 = vmatpush.msra.mxu0 %v418
    %572 = vmatpush.msra.mxu0 %v417
    %573 = vmatpush.msra.mxu0 %v416
    %574 = vmatpush.msra.mxu0 %v415
    %575 = vmatpush.msra.mxu0 %v414
    %576 = vmatmul.f32.gmra.mxu0 %v346
    %v577 = vpop.f32.mrf.mxu0
    %v578 = vadd.f32 %v558, %v577
    %579 = vdwg.mxu0
    %580 = vmatpush.msra.mxu0 %v445
    %581 = vmatpush.msra.mxu0 %v444
    %582 = vmatpush.msra.mxu0 %v443
    %583 = vmatpush.msra.mxu0 %v442
    %584 = vmatpush.msra.mxu0 %v441
    %585 = vmatpush.msra.mxu0 %v440
    %586 = vmatpush.msra.mxu0 %v439
    %587 = vmatpush.msra.mxu0 %v438
    %588 = vmatpush.msra.mxu0 %v437
    %589 = vmatpush.msra.mxu0 %v436
    %590 = vmatpush.msra.mxu0 %v435
    %591 = vmatpush.msra.mxu0 %v434
    %592 = vmatpush.msra.mxu0 %v433
    %593 = vmatpush.msra.mxu0 %v432
    %594 = vmatpush.msra.mxu0 %v431
    %595 = vmatpush.msra.mxu0 %v430
    %596 = vmatmul.f32.gmra.mxu0 %v347
    %v597 = vpop.f32.mrf.mxu0
    %v598 = vadd.f32 %v578, %v597
    %599 = vdwg.mxu0
    %600 = vmatpush.msra.mxu0 %v461
    %601 = vmatpush.msra.mxu0 %v460
    %602 = vmatpush.msra.mxu0 %v459
    %603 = vmatpush.msra.mxu0 %v458
    %604 = vmatpush.msra.mxu0 %v457
    %605 = vmatpush.msra.mxu0 %v456
    %606 = vmatpush.msra.mxu0 %v455
    %607 = vmatpush.msra.mxu0 %v454
    %608 = vmatpush.msra.mxu0 %v453
    %609 = vmatpush.msra.mxu0 %v452
    %610 = vmatpush.msra.mxu0 %v451
    %611 = vmatpush.msra.mxu0 %v450
    %612 = vmatpush.msra.mxu0 %v449
    %613 = vmatpush.msra.mxu0 %v448
    %614 = vmatpush.msra.mxu0 %v447
    %615 = vmatpush.msra.mxu0 %v446
    %616 = vmatmul.f32.gmra.mxu0 %v348
    %v617 = vpop.f32.mrf.mxu0
    %v618 = vadd.f32 %v598, %v617
    %619 = vdwg.mxu0
    %620 = vmatpush.msra.mxu0 %v477
    %621 = vmatpush.msra.mxu0 %v476
    %622 = vmatpush.msra.mxu0 %v475
    %623 = vmatpush.msra.mxu0 %v474
    %624 = vmatpush.msra.mxu0 %v473
    %625 = vmatpush.msra.mxu0 %v472
    %626 = vmatpush.msra.mxu0 %v471
    %627 = vmatpush.msra.mxu0 %v470
    %628 = vmatpush.msra.mxu0 %v469
    %629 = vmatpush.msra.mxu0 %v468
    %630 = vmatpush.msra.mxu0 %v467
    %631 = vmatpush.msra.mxu0 %v466
    %632 = vmatpush.msra.mxu0 %v465
    %633 = vmatpush.msra.mxu0 %v464
    %634 = vmatpush.msra.mxu0 %v463
    %635 = vmatpush.msra.mxu0 %v462
    %636 = vmatmul.f32.gmra.mxu0 %v349
    %v637 = vpop.f32.mrf.mxu0
    %v638 = vadd.f32 %v618, %v637
    %639 = vdwg.mxu0
    %641 = vrot.lane.b32.xlu0 %v638, 127
    %v642 = vpop.permute.xlu0 %641
    %vm644 = vcmask 64512
    %v645 = vsel %vm644, %v642, 0.0
    %646 = vadd.xlane.f32.xlu0 %v645
    %v647 = vpop.xlane.xlu0 %646
    %v648 = vrot.slane %v647, 4
    %v649 = vadd.f32 %v647, %v648
    %v650 = vrot.slane %v649, 2
    %v651 = vadd.f32 %v649, %v650
    %v652 = vrot.slane %v651, 1
    %v653 = vadd.f32 %v651, %v652
    %s654 = vtos %v653
    %v655 = vrcp.pop 64.0
    %v656 = vmul.f32 64.0, %v655
    %v657 = vsub.f32 1.0, %v656
    %v658 = vmul.f32 %v655, %v657
    %v659 = vadd.f32 %v655, %v658
    %vm660 = vweird.f32 %v655
    %v661 = vsel %vm660, %v655, %v659
    %s662 = vtos %v661
    %s663 = smul.f32 %s654, %s662
    %v664 = vstv %s663
    %v665 = vsub.f32 %v638, %v664
    %666 = vset.pattern.permute.xlu0 0
    %667 = vperm.xlu0 %666, %v638
    %v668 = vpop.permute.xlu0 %667
    %v670 = vadd.f32 %v668, %v665
    %672 = vrot.lane.b32.xlu0 %v670, 127
    %v673 = vpop.permute.xlu0 %672
    %675 = vst.msk [vmem:[#allocation5] sm:$0xff] %vm644, %v673
    // Predicated region
    $region18: #{tpu_custom_call.1} parent=1 // pred_check
      _
    $region19: #{tpu_custom_call.1} parent=1 // pred_check_branch
      %677 = sbr.rel (0) target = $region21
    $region20: #{tpu_custom_call.1} parent=1 // pred_region
      %679 = vsyncadd [#allocation4], 0
      %s681 = sshll.u32 [#allocation5], 4
      %s682 = int_to_ptr.vmem [resolvable:$true] %s681
      %s683 = sshll.u32 %s3, 4
      %s684 = int_to_ptr.hbm [resolvable:$true] %s683
      %686 = dma.vmem_to_hbm [thread:$0]  %s682, 128, %s684, [#allocation4]
    $region21: #{tpu_custom_call.1} parent=1 // pred_fallthru
      _
    // Predicated region
    $region22: #{tpu_custom_call.1} parent=1 // pred_check
      _
    $region23: #{tpu_custom_call.1} parent=1 // pred_check_branch
      %688 = sbr.rel (0) target = $region25
    $region24: #{tpu_custom_call.1} parent=1 // pred_region
      %690 = dma.done [#allocation4], 128
    $region25: #{tpu_custom_call.1} parent=1 // pred_fallthru
      _
    %691 = vsyncpa [#allocation3], 1
    %692 = vsyncpa [#allocation4], 1

</llo_original>
